<compile_context>
chip_gen: v7x
topology: tpu7x:2x2x1
jax: 0.10.0
libtpu: 0.0.40
codegen_flags: <defaults>
</compile_context>

<pallas_src>
import functools

import jax
import jax.numpy as jnp
from jax.experimental import pallas as pl
from jax.experimental.pallas import tpu as pltpu


def _round_up(x, m):
    return (x + m - 1) // m * m


_MAX_TB = 512                       # max batch-tile rows
_VMEM_BUDGET = 20 * 1024 * 1024     # working-set target, well under the scoped limit
_VMEM_LIMIT = 32 * 1024 * 1024      # safe on v5e/v6e (128 MiB phys) and v7x (64 MiB)


# --------------------------------------------------------------------------
# Fused kernel: LayerNorm + Linear (MXU, bf16 in / f32 acc) + bias + Softmax
# --------------------------------------------------------------------------

def _head_kernel(x_ref, w_ref, bias_ref, o_ref, *, d_valid, eps):
    # x_ref:    (TB, Dp)  native dtype; padded feature cols / batch rows are 0
    # w_ref:    (Dp, Np)  bf16  gamma-folded W.T (padded rows/cols are 0)
    # bias_ref: (1, Np)   f32   beta-folded bias; padded class cols are -1e30
    # o_ref:    (TB, Np)  f32   softmax probabilities (padded cols -> 0)
    x = x_ref[...].astype(jnp.float32)

    # ---- LayerNorm statistics in f32 ---------------------------------------
    # Padded feature columns are exactly zero, so plain sums over the padded
    # width are exact; var = E[x^2] - mean^2 avoids any mask/iota.
    inv_d = 1.0 / float(d_valid)
    mean = jnp.sum(x, axis=-1, keepdims=True) * inv_d
    var = jnp.maximum(
        jnp.sum(x * x, axis=-1, keepdims=True) * inv_d - mean * mean, 0.0)
    z = (x - mean) * jax.lax.rsqrt(var + eps)
    # gamma/beta are folded into w_ref / bias_ref (see prepare_head_params).
    # z's padded columns are nonzero (-mean*rsqrt) but hit zero rows of W.

    # ---- Dropout(0.2): identity in eval mode --------------------------------
    # TODO(synk): training-mode dropout masking not implemented (eval forward).

    # ---- Linear on the MXU: bf16 operands, f32 accumulation ----------------
    logits = jnp.dot(z.astype(jnp.bfloat16), w_ref[...],
                     preferred_element_type=jnp.float32) + bias_ref[...]

    # ---- Softmax: padded class columns carry bias -1e30 -> exp underflows to 0
    m = jnp.max(logits, axis=-1, keepdims=True)
    e = jnp.exp(logits - m)
    s = jnp.sum(e, axis=-1, keepdims=True)
    o_ref[...] = e * pl.reciprocal(s, approx=True)


# --------------------------------------------------------------------------
# Parameter prep (runs once, outside the jitted forward): fold LN affine,
# pad to lane-dense shapes, cast the weight to bf16.
# --------------------------------------------------------------------------

def prepare_head_params(ln_gamma, ln_beta, weight, bias):
    """ln_gamma/ln_beta: (in_dim,); weight: (out_dim, in_dim) [PyTorch layout];
    bias: (out_dim,).  Returns (w_p [Dp,Np] bf16, bias_p [1,Np] f32) with the
    LayerNorm affine folded in:  W' = gamma[:,None]*W.T,  b' = bias + beta@W.T."""
    in_dim = ln_gamma.shape[0]
    out_dim = bias.shape[0]
    Dp = _round_up(in_dim, 128)
    Np = _round_up(out_dim, 128)

    g = ln_gamma.astype(jnp.float32)
    b = ln_beta.astype(jnp.float32)
    w_t = jnp.transpose(weight).astype(jnp.float32)           # (in_dim, out_dim)
    w_fold = g[:, None] * w_t                                  # f32 master
    b_fold = bias.astype(jnp.float32) + b @ w_t                # f32 master

    w_p = jnp.zeros((Dp, Np), jnp.bfloat16).at[:in_dim, :out_dim].set(
        w_fold.astype(jnp.bfloat16))
    # Padded class columns get -1e30 so softmax assigns them exactly 0 weight
    # without any in-kernel masking.
    bias_p = jnp.full((1, Np), -1e30, jnp.float32).at[0, :out_dim].set(b_fold)
    return w_p, bias_p


# --------------------------------------------------------------------------
# Batch-tile selection (trace-time Python on static shapes)
# --------------------------------------------------------------------------

def _vmem_need(tb, Dp, Np, x_itemsize):
    return (2 * tb * Dp * x_itemsize        # x tile (double-buffered)
            + 2 * tb * Np * 4               # output tile (double-buffered, f32)
            + Dp * Np * 2 + 8 * Np * 4      # W (bf16) + bias (single-buffered)
            + 3 * tb * Dp * 4)              # in-kernel f32 temporaries headroom


def _select_batch_tile(B, Dp, Np, x_itemsize):
    """Return (TB, Bp) with Bp % TB == 0 so no rows are ever skipped."""
    tb_cap = min(_round_up(B, 8), _MAX_TB)
    while tb_cap > 8 and _vmem_need(tb_cap, Dp, Np, x_itemsize) > _VMEM_BUDGET:
        tb_cap -= 8
    if B <= tb_cap and B < 64:
        # Tiny batch: single full-extent tile, no padding, no copy.
        return B, B
    n_tiles = -(-B // tb_cap)
    if B >= 64:
        n_tiles = max(n_tiles, 2)   # keep both v7x TensorCores busy
    tb = min(_round_up(-(-B // n_tiles), 8), tb_cap)
    n_tiles = -(-B // tb)
    return tb, tb * n_tiles


# --------------------------------------------------------------------------
# Forward pass
# --------------------------------------------------------------------------

@functools.partial(jax.jit, static_argnames=("in_dim", "out_dim", "eps"))
def classification_head_forward(x, w_p, bias_p, *, in_dim, out_dim, eps=1e-5):
    """x: (B, in_dim) f32 or bf16 -> softmax probabilities (B, out_dim), f32."""
    B = x.shape[0]
    Dp, Np = w_p.shape

    TB, Bp = _select_batch_tile(B, Dp, Np, x.dtype.itemsize)

    # Pad only when actually needed (ragged feature dim and/or ragged last
    # batch tile); the common aligned case feeds x straight into pallas_call.
    pad_rows = Bp - B
    pad_cols = Dp - in_dim
    xk = jnp.pad(x, ((0, pad_rows), (0, pad_cols))) if (pad_rows or pad_cols) else x

    cost = pl.CostEstimate(
        flops=2 * Bp * Dp * Np,
        transcendentals=Bp * Np,
        bytes_accessed=(Bp * Dp * xk.dtype.itemsize + Dp * Np * 2
                        + Np * 4 + Bp * Np * 4),
    )

    out = pl.pallas_call(
        functools.partial(_head_kernel, d_valid=in_dim, eps=eps),
        out_shape=jax.ShapeDtypeStruct((Bp, Np), jnp.float32),
        grid_spec=pltpu.PrefetchScalarGridSpec(
            num_scalar_prefetch=0,
            grid=(Bp // TB,),
            in_specs=[
                pl.BlockSpec((TB, Dp), lambda i: (i, 0)),          # x tile
                pl.BlockSpec((Dp, Np), lambda i: (0, 0),           # W (grid-invariant)
                             pipeline_mode=pl.Buffered(1)),
                pl.BlockSpec((1, Np), lambda i: (0, 0),            # bias (grid-invariant)
                             pipeline_mode=pl.Buffered(1)),
            ],
            out_specs=pl.BlockSpec((TB, Np), lambda i: (i, 0)),
        ),
        compiler_params=pltpu.CompilerParams(
            dimension_semantics=("parallel",),
            vmem_limit_bytes=_VMEM_LIMIT,
        ),
        cost_estimate=cost,
    )(xk, w_p, bias_p)
    return out[:B, :out_dim]


# --------------------------------------------------------------------------
# Pure-JAX reference (correctness sanity check)
# --------------------------------------------------------------------------

def _ref_forward(x, ln_gamma, ln_beta, weight, bias, eps=1e-5):
    xf = x.astype(jnp.float32)
    mean = jnp.mean(xf, axis=-1, keepdims=True)
    var = jnp.mean((xf - mean) ** 2, axis=-1, keepdims=True)
    xn = (xf - mean) * jax.lax.rsqrt(var + eps) * ln_gamma + ln_beta
    logits = xn @ weight.T + bias
    return jax.nn.softmax(logits, axis=-1)


if __name__ == "__main__":
    B, IN_DIM, OUT_DIM = 2, 256, 10
    key = jax.random.PRNGKey(0)
    kx, kg, kb, kw, kbias = jax.random.split(key, 5)

    x = jax.random.normal(kx, (B, IN_DIM), jnp.float32)
    ln_gamma = 1.0 + 0.1 * jax.random.normal(kg, (IN_DIM,), jnp.float32)
    ln_beta = 0.1 * jax.random.normal(kb, (IN_DIM,), jnp.float32)
    weight = (1.0 / IN_DIM ** 0.5) * jax.random.normal(kw, (OUT_DIM, IN_DIM), jnp.float32)
    bias = 0.01 * jax.random.normal(kbias, (OUT_DIM,), jnp.float32)

    w_p, bias_p = prepare_head_params(ln_gamma, ln_beta, weight, bias)
    ref = _ref_forward(x, ln_gamma, ln_beta, weight, bias)

    # f32 input path (256 % 128 == 0 and B is a single full-extent tile -> no
    # wrapper-side copy of x at all).
    probs = classification_head_forward(x, w_p, bias_p, in_dim=IN_DIM, out_dim=OUT_DIM)
    probs = jax.block_until_ready(probs)

    assert probs.shape == (B, OUT_DIM), probs.shape
    assert bool(jnp.all(jnp.isfinite(probs)))
    row_sums = jnp.sum(probs, axis=-1)
    assert bool(jnp.all(jnp.abs(row_sums - 1.0) < 1e-2)), row_sums
    assert float(jnp.max(jnp.abs(probs - ref))) < 5e-2

    # bf16 input path (native-dtype feed; LN stats still computed in f32 in-kernel).
    probs_bf16 = classification_head_forward(x.astype(jnp.bfloat16), w_p, bias_p,
                                             in_dim=IN_DIM, out_dim=OUT_DIM)
    probs_bf16 = jax.block_until_ready(probs_bf16)
    assert bool(jnp.all(jnp.isfinite(probs_bf16)))
    assert float(jnp.max(jnp.abs(probs_bf16 - ref))) < 1e-1

    print("KERNEL_OK")
</pallas_src>

<mosaic_0001>
module attributes {stable_mosaic.version = 11 : i64} {
  func.func @_head_kernel(%arg0: i32, %arg1: memref<2x256xf32, #tpu.memory_space<vmem>>, %arg2: memref<256x128xbf16, #tpu.memory_space<vmem>>, %arg3: memref<1x128xf32, #tpu.memory_space<vmem>>, %arg4: memref<2x128xf32, #tpu.memory_space<vmem>>) attributes {dimension_semantics = [#tpu.dimension_semantics<parallel>], iteration_bounds = array<i64: 1>, scalar_prefetch = 0 : i64, scratch_operands = 0 : i64, tpu.core_type = #tpu.core_type<tc>, window_params = [{transform_indices = @transform_0, window_bounds = array<i64: 2, 256>}, {pipeline_mode = #tpu.pipeline_mode<synchronous>, transform_indices = @transform_1, window_bounds = array<i64: 256, 128>}, {pipeline_mode = #tpu.pipeline_mode<synchronous>, transform_indices = @transform_2, window_bounds = array<i64: 1, 128>}, {transform_indices = @transform_3, window_bounds = array<i64: 2, 128>}]} {
    %c0 = arith.constant 0 : index
    %c0_0 = arith.constant 0 : index
    %0 = vector.load %arg1[%c0, %c0_0] : memref<2x256xf32, #tpu.memory_space<vmem>>, vector<2x256xf32>
    %cst = arith.constant dense<0.000000e+00> : vector<2xf32>
    %1 = vector.multi_reduction <add>, %0, %cst [1] : vector<2x256xf32> to vector<2xf32>
    %2 = vector.shape_cast %1 : vector<2xf32> to vector<2x1xf32>
    %cst_1 = arith.constant 3.906250e-03 : f32
    %3 = vector.broadcast %cst_1 : f32 to vector<2x1xf32>
    %4 = arith.mulf %2, %3 : vector<2x1xf32>
    %5 = arith.mulf %0, %0 : vector<2x256xf32>
    %cst_2 = arith.constant dense<0.000000e+00> : vector<2xf32>
    %6 = vector.multi_reduction <add>, %5, %cst_2 [1] : vector<2x256xf32> to vector<2xf32>
    %7 = vector.shape_cast %6 : vector<2xf32> to vector<2x1xf32>
    %cst_3 = arith.constant 3.906250e-03 : f32
    %8 = vector.broadcast %cst_3 : f32 to vector<2x1xf32>
    %9 = arith.mulf %7, %8 : vector<2x1xf32>
    %10 = arith.mulf %4, %4 : vector<2x1xf32>
    %11 = arith.subf %9, %10 : vector<2x1xf32>
    %cst_4 = arith.constant 0.000000e+00 : f32
    %12 = vector.broadcast %cst_4 : f32 to vector<2x1xf32>
    %13 = arith.maximumf %11, %12 : vector<2x1xf32>
    %14 = vector.broadcast %4 : vector<2x1xf32> to vector<2x256xf32>
    %15 = arith.subf %0, %14 : vector<2x256xf32>
    %cst_5 = arith.constant 9.99999974E-6 : f32
    %16 = vector.broadcast %cst_5 : f32 to vector<2x1xf32>
    %17 = arith.addf %13, %16 : vector<2x1xf32>
    %18 = math.rsqrt %17 : vector<2x1xf32>
    %19 = vector.broadcast %18 : vector<2x1xf32> to vector<2x256xf32>
    %20 = arith.mulf %15, %19 : vector<2x256xf32>
    %21 = arith.truncf %20 : vector<2x256xf32> to vector<2x256xbf16>
    %c0_6 = arith.constant 0 : index
    %c0_7 = arith.constant 0 : index
    %22 = vector.load %arg2[%c0_6, %c0_7] : memref<256x128xbf16, #tpu.memory_space<vmem>>, vector<256x128xbf16>
    %cst_8 = arith.constant dense<0.000000e+00> : vector<2x128xf32>
    %23 = tpu.matmul %21, %22, %cst_8 {dimension_numbers = #tpu.dot_dimension_numbers<[1], [0], [0], [1], [0, 0, 1, 1], [], []>} : vector<2x256xbf16>, vector<256x128xbf16>, vector<2x128xf32> -> vector<2x128xf32>
    %c0_9 = arith.constant 0 : index
    %c0_10 = arith.constant 0 : index
    %24 = vector.load %arg3[%c0_9, %c0_10] : memref<1x128xf32, #tpu.memory_space<vmem>>, vector<1x128xf32>
    %25 = vector.broadcast %24 : vector<1x128xf32> to vector<2x128xf32>
    %26 = arith.addf %23, %25 : vector<2x128xf32>
    %cst_11 = arith.constant dense<0xFF800000> : vector<2xf32>
    %27 = vector.multi_reduction <maximumf>, %26, %cst_11 [1] : vector<2x128xf32> to vector<2xf32>
    %28 = vector.shape_cast %27 : vector<2xf32> to vector<2x1xf32>
    %29 = vector.broadcast %28 : vector<2x1xf32> to vector<2x128xf32>
    %30 = arith.subf %26, %29 : vector<2x128xf32>
    %31 = math.exp %30 : vector<2x128xf32>
    %cst_12 = arith.constant dense<0.000000e+00> : vector<2xf32>
    %32 = vector.multi_reduction <add>, %31, %cst_12 [1] : vector<2x128xf32> to vector<2xf32>
    %33 = vector.shape_cast %32 : vector<2xf32> to vector<2x1xf32>
    %34 = tpu.reciprocal %33 {approx = true} : vector<2x1xf32> -> vector<2x1xf32>
    %35 = vector.broadcast %34 : vector<2x1xf32> to vector<2x128xf32>
    %36 = arith.mulf %31, %35 : vector<2x128xf32>
    %c0_13 = arith.constant 0 : index
    %c0_14 = arith.constant 0 : index
    %37 = vector.load %arg4[%c0_13, %c0_14] : memref<2x128xf32, #tpu.memory_space<vmem>>, vector<2x128xf32>
    tpu.vector_store %arg4[%c0_13, %c0_14], %36 {strides = array<i32>} : memref<2x128xf32, #tpu.memory_space<vmem>>, vector<2x128xf32>,
    return
  }
  func.func @transform_0(%arg0: i32) -> (i32, i32) {
    %c0_i32 = arith.constant 0 : i32
    %c0_i32_0 = arith.constant 0 : i32
    return %arg0, %c0_i32 : i32, i32
  }
  func.func @transform_1(%arg0: i32) -> (i32, i32) {
    %c0_i32 = arith.constant 0 : i32
    %c0_i32_0 = arith.constant 0 : i32
    %c0_i32_1 = arith.constant 0 : i32
    return %c0_i32, %c0_i32_0 : i32, i32
  }
  func.func @transform_2(%arg0: i32) -> (i32, i32) {
    %c0_i32 = arith.constant 0 : i32
    %c0_i32_0 = arith.constant 0 : i32
    %c0_i32_1 = arith.constant 0 : i32
    return %c0_i32, %c0_i32_0 : i32, i32
  }
  func.func @transform_3(%arg0: i32) -> (i32, i32) {
    %c0_i32 = arith.constant 0 : i32
    %c0_i32_0 = arith.constant 0 : i32
    return %arg0, %c0_i32 : i32, i32
  }
}

</mosaic_0001>

<llo_original>
// kernel: classification_head_forward.1
$region0: #{classification_head_forward.1}
  #allocation0 [shape = 'u32[]', space=smem, size = 0x4, offset = 0x4, fixed_abs, tag = 'smem constant byte address 0x4 - core index']
  #allocation1 [shape = 'u32[144,128]{1,0:T(1,128)}', space=vmem, size = 0x12000, scoped, tag = 'internal scratch']
  %s0 = inlined_call_operand.hbm [shape: f32[2,256], index: 0, kind: input, shape index: {}]
  %s1 = inlined_call_operand.hbm [shape: bf16[256,128], index: 1, kind: input, shape index: {}]
  %s2 = inlined_call_operand.vmem [shape: f32[1,128], index: 2, kind: input, shape index: {}]
  %s3 = inlined_call_operand.hbm [shape: f32[2,128], index: 3, kind: output, shape index: {}]
  %s4 = sld [smem:[#allocation0]]
  $region30: #{classification_head_forward.1} parent=0
    _
  %s6 = ssub.s32 1, %s4
  %s7 = scalar_select 0, %s6, %s4
  $region1: #{classification_head_forward.1} parent=0
    #allocation2 [shape = 'u8[2048]{0}', space=vmem, size = 0x800, scoped, tag = 'input window, operand 0, single buffered']
    #allocation3 [shape = 's32[1]{0}', space=sflag, size = 0x4, scoped, tag = 'scoped memory for classification_head_forward.1']
    #allocation4 [shape = 's32[1]{0}', space=sflag, size = 0x4, scoped, tag = 'scoped memory for classification_head_forward.1']
    #allocation5 [shape = 'u8[65536]{0}', space=vmem, size = 0x10000, scoped, tag = 'input window, operand 1, single buffered']
    #allocation6 [shape = 's32[1]{0}', space=sflag, size = 0x4, scoped, tag = 'scoped memory for classification_head_forward.1']
    #allocation7 [shape = 'u8[1024]{0}', space=vmem, size = 0x400, scoped, tag = 'output window, operand 0, single buffered']
    %8 = vsyncpa [#allocation3], 0
    %9 = vsyncpa [#allocation6], 0
    %10 = vsyncpa [#allocation4], 0
    // Predicated region
    $region2: #{classification_head_forward.1} parent=1 // pred_check
      _
    $region3: #{classification_head_forward.1} parent=1 // pred_check_branch
      %12 = sbr.rel (0) target = $region5
    $region4: #{classification_head_forward.1} parent=1 // pred_region
      %s14 = ssub.s32 64, 64
      %15 = vsyncadd [#allocation3], %s14
      %s17 = sshll.u32 [#allocation2], 4
      %s18 = int_to_ptr.vmem [resolvable:$true] %s17
      %20 = dma.hbm_to_vmem [thread:$0]  %s0, 64, %s18, [#allocation3]
    $region5: #{classification_head_forward.1} parent=1 // pred_fallthru
      _
    // Predicated region
    $region6: #{classification_head_forward.1} parent=1 // pred_check
      _
    $region7: #{classification_head_forward.1} parent=1 // pred_check_branch
      %22 = sbr.rel (0) target = $region9
    $region8: #{classification_head_forward.1} parent=1 // pred_region
      %s24 = ssub.s32 2048, 2048
      %25 = vsyncadd [#allocation6], %s24
      %s26 = sshll.u32 [#allocation5], 4
      %s27 = int_to_ptr.vmem [resolvable:$true] %s26
      %32 = dma.hbm_to_vmem [thread:$0]  %s1, 2048, %s27, [#allocation6], 64, 64, 4
    $region9: #{classification_head_forward.1} parent=1 // pred_fallthru
      _
    // Predicated region
    $region10: #{classification_head_forward.1} parent=1 // pred_check
      _
    $region11: #{classification_head_forward.1} parent=1 // pred_check_branch
      %34 = sbr.rel (0) target = $region13
    $region12: #{classification_head_forward.1} parent=1 // pred_region
      _
    $region13: #{classification_head_forward.1} parent=1 // pred_fallthru
      _
    // Predicated region
    $region14: #{classification_head_forward.1} parent=1 // pred_check
      _
    $region15: #{classification_head_forward.1} parent=1 // pred_check_branch
      %36 = sbr.rel (0) target = $region17
    $region16: #{classification_head_forward.1} parent=1 // pred_region
      %37 = dma.done [#allocation3], 64
    $region17: #{classification_head_forward.1} parent=1 // pred_fallthru
      _
    // Predicated region
    $region18: #{classification_head_forward.1} parent=1 // pred_check
      _
    $region19: #{classification_head_forward.1} parent=1 // pred_check_branch
      %39 = sbr.rel (0) target = $region21
    $region20: #{classification_head_forward.1} parent=1 // pred_region
      %40 = dma.done [#allocation6], 2048
    $region21: #{classification_head_forward.1} parent=1 // pred_fallthru
      _
    %v42 = vld [vmem:[#allocation2] sm:$0xf]
    %v45 = vunpack.c.l.s4 1983009808
    %v46 = vunpack.c.0.s8 %v45
    %v47 = vlaneseq
    %v48 = vshrl.u32 %v47, 7
    %v49 = vsub.s32 %v46, %v48
    %v50 = vrot.slane %v42, %v49
    %v51 = vcombine.high %v50, %v50
    %vm54 = vcmask 1041408
    %v55 = vsel %vm54, %v50, 0.0
    %v56 = vsel %vm54, %v51, 0.0
    %v57 = vadd.f32 %v55, %v56
    %58 = vadd.xlane.f32.xlu0 %v57
    %v59 = vpop.xlane.xlu0 %58
    %v60 = vmul.f32 %v59, 0.00390625
    %v61 = vmul.f32 %v42, %v42
    %v64 = vunpack.c.l.s4 1983009808
    %v65 = vunpack.c.0.s8 %v64
    %v66 = vlaneseq
    %v67 = vshrl.u32 %v66, 7
    %v68 = vsub.s32 %v65, %v67
    %v69 = vrot.slane %v61, %v68
    %v70 = vcombine.high %v69, %v69
    %v73 = vsel %vm54, %v69, 0.0
    %v74 = vsel %vm54, %v70, 0.0
    %v75 = vadd.f32 %v73, %v74
    %76 = vadd.xlane.f32.xlu0 %v75
    %v77 = vpop.xlane.xlu0 %76
    %v78 = vmul.f32 %v77, 0.00390625
    %v79 = vmul.f32 %v60, %v60
    %v80 = vsub.f32 %v78, %v79
    %v81 = vmax.f32 %v80, 0.0
    %v84 = vunpack.c.l.s4 269488144
    %v85 = vunpack.c.0.s8 %v84
    %v86 = vlaneseq
    %v87 = vshrl.u32 %v86, 7
    %v88 = vsub.s32 %v85, %v87
    %v89 = vrot.slane %v60, %v88
    %v91 = vsub.f32 %v42, %v89
    %v92 = vadd.f32 %v81, 1e-05
    %v93 = vrsqrt.pop %v92
    %v96 = vunpack.c.l.s4 269488144
    %v97 = vunpack.c.0.s8 %v96
    %v98 = vlaneseq
    %v99 = vshrl.u32 %v98, 7
    %v100 = vsub.s32 %v97, %v99
    %v101 = vrot.slane %v93, %v100
    %v103 = vmul.f32 %v91, %v101
    %v106 = vunpack.c.l.s4 1983009808
    %v107 = vunpack.c.0.s8 %v106
    %v108 = vlaneseq
    %v109 = vshrl.u32 %v108, 7
    %v110 = vsub.s32 %v107, %v109
    %v111 = vrot.slane %v103, %v110
    %v112 = vcombine.high %v111, %v111
    %v115 = vpack.c.bf16 %v111, %v111
    %v116 = vpack.c.bf16 %v112, %v112
    %v117 = vld [vmem:[#allocation5] sm:$0xf]
    %v118 = vld [vmem:[#allocation5 + $0x4] sm:$0xf]
    %v119 = vld [vmem:[#allocation5 + $0x8] sm:$0xf]
    %v120 = vld [vmem:[#allocation5 + $0xc] sm:$0xf]
    %v121 = vld [vmem:[#allocation5 + $0x10] sm:$0xf]
    %v122 = vld [vmem:[#allocation5 + $0x14] sm:$0xf]
    %v123 = vld [vmem:[#allocation5 + $0x18] sm:$0xf]
    %v124 = vld [vmem:[#allocation5 + $0x1c] sm:$0xf]
    %v125 = vld [vmem:[#allocation5 + $0x20] sm:$0xf]
    %v126 = vld [vmem:[#allocation5 + $0x24] sm:$0xf]
    %v127 = vld [vmem:[#allocation5 + $0x28] sm:$0xf]
    %v128 = vld [vmem:[#allocation5 + $0x2c] sm:$0xf]
    %v129 = vld [vmem:[#allocation5 + $0x30] sm:$0xf]
    %v130 = vld [vmem:[#allocation5 + $0x34] sm:$0xf]
    %v131 = vld [vmem:[#allocation5 + $0x38] sm:$0xf]
    %v132 = vld [vmem:[#allocation5 + $0x3c] sm:$0xf]
    %v133 = vld [vmem:[#allocation5 + $0x40] sm:$0xf]
    %v134 = vld [vmem:[#allocation5 + $0x44] sm:$0xf]
    %v135 = vld [vmem:[#allocation5 + $0x48] sm:$0xf]
    %v136 = vld [vmem:[#allocation5 + $0x4c] sm:$0xf]
    %v137 = vld [vmem:[#allocation5 + $0x50] sm:$0xf]
    %v138 = vld [vmem:[#allocation5 + $0x54] sm:$0xf]
    %v139 = vld [vmem:[#allocation5 + $0x58] sm:$0xf]
    %v140 = vld [vmem:[#allocation5 + $0x5c] sm:$0xf]
    %v141 = vld [vmem:[#allocation5 + $0x60] sm:$0xf]
    %v142 = vld [vmem:[#allocation5 + $0x64] sm:$0xf]
    %v143 = vld [vmem:[#allocation5 + $0x68] sm:$0xf]
    %v144 = vld [vmem:[#allocation5 + $0x6c] sm:$0xf]
    %v145 = vld [vmem:[#allocation5 + $0x70] sm:$0xf]
    %v146 = vld [vmem:[#allocation5 + $0x74] sm:$0xf]
    %v147 = vld [vmem:[#allocation5 + $0x78] sm:$0xf]
    %v148 = vld [vmem:[#allocation5 + $0x7c] sm:$0xf]
    %v149 = vld [vmem:[%s2] sm:$0x1]
    %v151 = vlaneseq
    %v152 = vshrl.u32 %v151, 7
    %v153 = vsub.s32 0, %v152
    %v154 = vrot.slane %v149, %v153
    %v188 = vunpack.c.l.b16 %v117
    %v189 = vunpack.c.l.b16 %v118
    %v190 = vunpack.c.l.b16 %v119
    %v191 = vunpack.c.l.b16 %v120
    %v192 = vunpack.c.l.b16 %v121
    %v193 = vunpack.c.l.b16 %v122
    %v194 = vunpack.c.l.b16 %v123
    %v195 = vunpack.c.l.b16 %v124
    %v196 = vunpack.c.l.b16 %v125
    %v197 = vunpack.c.l.b16 %v126
    %v198 = vunpack.c.l.b16 %v127
    %v199 = vunpack.c.l.b16 %v128
    %v200 = vunpack.c.l.b16 %v129
    %v201 = vunpack.c.l.b16 %v130
    %v202 = vunpack.c.l.b16 %v131
    %v203 = vunpack.c.l.b16 %v132
    %v204 = vunpack.c.l.b16 %v133
    %v205 = vunpack.c.l.b16 %v134
    %v206 = vunpack.c.l.b16 %v135
    %v207 = vunpack.c.l.b16 %v136
    %v208 = vunpack.c.l.b16 %v137
    %v209 = vunpack.c.l.b16 %v138
    %v210 = vunpack.c.l.b16 %v139
    %v211 = vunpack.c.l.b16 %v140
    %v212 = vunpack.c.l.b16 %v141
    %v213 = vunpack.c.l.b16 %v142
    %v214 = vunpack.c.l.b16 %v143
    %v215 = vunpack.c.l.b16 %v144
    %v216 = vunpack.c.l.b16 %v145
    %v217 = vunpack.c.l.b16 %v146
    %v218 = vunpack.c.l.b16 %v147
    %v219 = vunpack.c.l.b16 %v148
    %v220 = vpack.c.b16 %v189, %v188
    %v221 = vpack.c.b16 %v191, %v190
    %v222 = vpack.c.b16 %v193, %v192
    %v223 = vpack.c.b16 %v195, %v194
    %v224 = vpack.c.b16 %v197, %v196
    %v225 = vpack.c.b16 %v199, %v198
    %v226 = vpack.c.b16 %v201, %v200
    %v227 = vpack.c.b16 %v203, %v202
    %v228 = vpack.c.b16 %v205, %v204
    %v229 = vpack.c.b16 %v207, %v206
    %v230 = vpack.c.b16 %v209, %v208
    %v231 = vpack.c.b16 %v211, %v210
    %v232 = vpack.c.b16 %v213, %v212
    %v233 = vpack.c.b16 %v215, %v214
    %v234 = vpack.c.b16 %v217, %v216
    %v235 = vpack.c.b16 %v219, %v218
    %252 = vmatprep.subr.bf16.mxu0 0
    %253 = vmatpush1.bf16.msra.mxu0 %v220
    %254 = vmatprep.subr.bf16.mxu0 0
    %255 = vmatpush1.bf16.msra.mxu0 %v221
    %256 = vmatprep.subr.bf16.mxu0 0
    %257 = vmatpush1.bf16.msra.mxu0 %v222
    %258 = vmatprep.subr.bf16.mxu0 0
    %259 = vmatpush1.bf16.msra.mxu0 %v223
    %260 = vmatprep.subr.bf16.mxu0 0
    %261 = vmatpush1.bf16.msra.mxu0 %v224
    %262 = vmatprep.subr.bf16.mxu0 0
    %263 = vmatpush1.bf16.msra.mxu0 %v225
    %264 = vmatprep.subr.bf16.mxu0 0
    %265 = vmatpush1.bf16.msra.mxu0 %v226
    %266 = vmatprep.subr.bf16.mxu0 0
    %267 = vmatpush1.bf16.msra.mxu0 %v227
    %268 = vmatprep.subr.bf16.mxu0 0
    %269 = vmatpush1.bf16.msra.mxu0 %v228
    %270 = vmatprep.subr.bf16.mxu0 0
    %271 = vmatpush1.bf16.msra.mxu0 %v229
    %272 = vmatprep.subr.bf16.mxu0 0
    %273 = vmatpush1.bf16.msra.mxu0 %v230
    %274 = vmatprep.subr.bf16.mxu0 0
    %275 = vmatpush1.bf16.msra.mxu0 %v231
    %276 = vmatprep.subr.bf16.mxu0 0
    %277 = vmatpush1.bf16.msra.mxu0 %v232
    %278 = vmatprep.subr.bf16.mxu0 0
    %279 = vmatpush1.bf16.msra.mxu0 %v233
    %280 = vmatprep.subr.bf16.mxu0 0
    %281 = vmatpush1.bf16.msra.mxu0 %v234
    %282 = vmatprep.subr.bf16.mxu0 0
    %283 = vmatpush1.bf16.msra.mxu0 %v235
    %284 = vmatprep.mubr.bf16.mxu0 %v116
    %285 = vmatmul.mubr.bf16.gmra.mrb[0].mxu0 %v115
    %v286 = vpop.f32.mrb[0].mxu0
    %v287 = vadd.f32 %v154, %v286
    %v288 = vpop.f32.mrb[0].mxu0
    %v289 = vpop.f32.mrb[0].mxu0
    %v290 = vpop.f32.mrb[0].mxu0
    %291 = vdwg.mxu0
    %v292 = vsel %vm54, %v287, -inf
    %293 = vmax.xlane.f32.xlu0 %v292
    %v294 = vpop.xlane.xlu0 %293
    %v295 = vsub.f32 %v287, %v294
    %v296 = vmul.f32 %v295, 1.442695
    %v297 = vpow.pop %v296
    %v298 = vsel %vm54, %v297, 0.0
    %299 = vadd.xlane.f32.xlu0 %v298
    %v300 = vpop.xlane.xlu0 %299
    %v301 = vrcp.pop %v300
    %v302 = vmul.f32 %v297, %v301
    %303 = vst [vmem:[#allocation7] sm:$0x3] %v302
    // Predicated region
    $region22: #{classification_head_forward.1} parent=1 // pred_check
      _
    $region23: #{classification_head_forward.1} parent=1 // pred_check_branch
      %305 = sbr.rel (0) target = $region25
    $region24: #{classification_head_forward.1} parent=1 // pred_region
      %s307 = ssub.s32 32, 32
      %308 = vsyncadd [#allocation4], %s307
      %s310 = sshll.u32 [#allocation7], 4
      %s311 = int_to_ptr.vmem [resolvable:$true] %s310
      %313 = dma.vmem_to_hbm [thread:$0]  %s311, 32, %s3, [#allocation4]
    $region25: #{classification_head_forward.1} parent=1 // pred_fallthru
      _
    // Predicated region
    $region26: #{classification_head_forward.1} parent=1 // pred_check
      _
    $region27: #{classification_head_forward.1} parent=1 // pred_check_branch
      %315 = sbr.rel (0) target = $region29
    $region28: #{classification_head_forward.1} parent=1 // pred_region
      %316 = dma.done [#allocation4], 32
    $region29: #{classification_head_forward.1} parent=1 // pred_fallthru
      _
    %317 = vsyncpa [#allocation3], 1
    %318 = vsyncpa [#allocation6], 1
    %319 = vsyncpa [#allocation4], 1

</llo_original>
